<compile_context>
chip_gen: v6e
topology: v6e:2x2x1
jax: 0.10.0
libtpu: 0.0.40
codegen_flags: <defaults>
</compile_context>

<pallas_src>
import functools

import jax
import jax.numpy as jnp
from jax import lax
from jax.experimental import pallas as pl
from jax.experimental.pallas import tpu as pltpu


def _round_up(v, m):
    return ((v + m - 1) // m) * m


def _logreg_kernel(x_ref, w_ref, b_ref, o_ref, *, total_f, f_chunk):
    # x_ref: (tb, Fc) VMEM   w_ref: (1, Fc) VMEM   b_ref: (1, 1) SMEM
    # o_ref: (tb, 1) VMEM — resident across the F axis, used as the accumulator.
    k = pl.program_id(1)

    @pl.when(k == 0)
    def _init():
        o_ref[...] = jnp.zeros_like(o_ref)

    p = x_ref[...] * w_ref[...]                          # VPU, (tb, Fc)
    if total_f % f_chunk != 0:
        # Ragged last F chunk: columns past F hold stale VMEM bits -> mask them.
        col = k * f_chunk + lax.broadcasted_iota(jnp.int32, p.shape, 1)
        p = jnp.where(col < total_f, p, 0.0)
    o_ref[...] += jnp.sum(p, axis=-1, keepdims=True)     # XLU lane reduce

    @pl.when(k == pl.num_programs(1) - 1)
    def _finalize():
        z = o_ref[...] + b_ref[0, 0]                     # scalar bias from SMEM
        o_ref[...] = 1.0 / (1.0 + jnp.exp(-z))           # exact sigmoid (EUP exp)


def logistic_regression(x, weight, bias, *, f_chunk_max=4096,
                        target_step_bytes=8 << 20):
    """x: (B, F) f32, weight: (1, F) f32, bias: (1,) f32 -> (B, 1) f32."""
    B, F = x.shape
    x = x.astype(jnp.float32)
    w_row = weight.reshape(1, F).astype(jnp.float32)
    b = bias.reshape(1, 1).astype(jnp.float32)

    # ---- F chunking (bounds the x-tile footprint for large F) ----
    fc = F if F <= f_chunk_max else f_chunk_max          # f_chunk_max is a 128-multiple
    nk = pl.cdiv(F, fc)

    # ---- generation-aware VMEM budget ----
    try:
        vmem_cap = int(pltpu.get_tpu_info().vmem_capacity_bytes)
    except Exception:
        vmem_cap = 64 * 1024 * 1024                      # conservative (v7x per-TC)
    budget = (3 * vmem_cap) // 4                         # ~48 MiB v7x, ~96 MiB v5e/v6e

    # ---- batch tile: biggest tile that moves >= target bytes of x per step
    #      and whose double-buffered pipeline fits the VMEM budget ----
    x_row_bytes = fc * 4
    per_row_vmem = 2 * x_row_bytes + 2 * 128 * 4         # x dbl-buf + lane-padded out dbl-buf
    fixed_vmem = 2 * 8 * fc * 4 + (1 << 20)              # sublane-padded weight dbl-buf + slack
    tb = min(
        max(8, (budget - fixed_vmem) // per_row_vmem),
        max(8, target_step_bytes // x_row_bytes),
        32768,
        _round_up(B, 8),
    )
    if B >= 16:                                          # >=2 batch steps -> both v7x TCs busy
        tb = min(tb, _round_up(pl.cdiv(B, 2), 8))
    tb = max(8, (tb // 8) * 8)

    grid = (pl.cdiv(B, tb), nk)
    kernel = functools.partial(_logreg_kernel, total_f=F, f_chunk=fc)

    return pl.pallas_call(
        kernel,
        out_shape=jax.ShapeDtypeStruct((B, 1), jnp.float32),
        grid=grid,
        in_specs=[
            pl.BlockSpec((tb, fc), lambda i, k: (i, k)),          # streamed x tiles
            pl.BlockSpec((1, fc), lambda i, k: (0, k)),           # weight chunk
            pl.BlockSpec(memory_space=pltpu.MemorySpace.SMEM),    # scalar bias
        ],
        out_specs=pl.BlockSpec((tb, 1), lambda i, k: (i, 0)),     # accumulator over k
        compiler_params=pltpu.CompilerParams(
            dimension_semantics=("parallel", "arbitrary"),
            vmem_limit_bytes=int(budget),
        ),
    )(x, w_row, b)


if __name__ == "__main__":
    key = jax.random.PRNGKey(0)
    kx, kw, kb = jax.random.split(key, 3)

    batch = 8
    n_input_features = 32

    # Example input
    x = jax.random.normal(kx, (batch, n_input_features), dtype=jnp.float32)

    # Deterministic parameter init matching nn.Linear(n_input_features, 1):
    # weight (1, F), bias (1,).
    bound = 1.0 / jnp.sqrt(jnp.float32(n_input_features))
    weight = jax.random.uniform(
        kw, (1, n_input_features), minval=-bound, maxval=bound, dtype=jnp.float32
    )
    bias = jax.random.uniform(kb, (1,), minval=-bound, maxval=bound, dtype=jnp.float32)

    y = logistic_regression(x, weight, bias)
    jax.block_until_ready(y)

    # Reference: same math as torch.sigmoid(self.linear(x))
    y_ref = 1.0 / (1.0 + jnp.exp(-(x @ weight.T + bias)))
    assert y.shape == (batch, 1)
    assert jnp.allclose(y, y_ref, atol=1e-5, rtol=1e-5)

    print("KERNEL_OK")
</pallas_src>

<mosaic_0001>
module attributes {stable_mosaic.version = 11 : i64} {
  func.func @_logreg_kernel(%arg0: i32, %arg1: i32, %arg2: memref<8x32xf32, #tpu.memory_space<vmem>>, %arg3: memref<1x32xf32, #tpu.memory_space<vmem>>, %arg4: memref<1x1xf32, #tpu.memory_space<smem>>, %arg5: memref<8x1xf32, #tpu.memory_space<vmem>>) attributes {dimension_semantics = [#tpu.dimension_semantics<parallel>, #tpu.dimension_semantics<arbitrary>], iteration_bounds = array<i64: 1, 1>, scalar_prefetch = 0 : i64, scratch_operands = 0 : i64, tpu.core_type = #tpu.core_type<tc>, window_params = [{transform_indices = @transform_0, window_bounds = array<i64: 8, 32>}, {transform_indices = @transform_1, window_bounds = array<i64: 1, 32>}, {transform_indices = @transform_2, window_bounds = array<i64: 1, 1>}, {transform_indices = @transform_3, window_bounds = array<i64: 8, 1>}]} {
    %c0_i32 = arith.constant 0 : i32
    %0 = arith.cmpi eq, %arg1, %c0_i32 : i32
    %1 = arith.extui %0 : i1 to i32
    %c0_i32_0 = arith.constant 0 : i32
    %2 = arith.cmpi ne, %1, %c0_i32_0 : i32
    scf.if %2 {
      %cst_10 = arith.constant 0.000000e+00 : f32
      %15 = vector.broadcast %cst_10 : f32 to vector<8x1xf32>
      %c0_11 = arith.constant 0 : index
      %c0_12 = arith.constant 0 : index
      %16 = vector.load %arg5[%c0_11, %c0_12] : memref<8x1xf32, #tpu.memory_space<vmem>>, vector<8x1xf32>
      tpu.vector_store %arg5[%c0_11, %c0_12], %15 {strides = array<i32>} : memref<8x1xf32, #tpu.memory_space<vmem>>, vector<8x1xf32>,
    } else {
    }
    %c0 = arith.constant 0 : index
    %c0_1 = arith.constant 0 : index
    %3 = vector.load %arg2[%c0, %c0_1] : memref<8x32xf32, #tpu.memory_space<vmem>>, vector<8x32xf32>
    %c0_2 = arith.constant 0 : index
    %c0_3 = arith.constant 0 : index
    %4 = vector.load %arg3[%c0_2, %c0_3] : memref<1x32xf32, #tpu.memory_space<vmem>>, vector<1x32xf32>
    %5 = vector.broadcast %4 : vector<1x32xf32> to vector<8x32xf32>
    %6 = arith.mulf %3, %5 : vector<8x32xf32>
    %c0_4 = arith.constant 0 : index
    %c0_5 = arith.constant 0 : index
    %7 = vector.load %arg5[%c0_4, %c0_5] : memref<8x1xf32, #tpu.memory_space<vmem>>, vector<8x1xf32>
    %cst = arith.constant dense<0.000000e+00> : vector<8xf32>
    %8 = vector.multi_reduction <add>, %6, %cst [1] : vector<8x32xf32> to vector<8xf32>
    %9 = vector.shape_cast %8 : vector<8xf32> to vector<8x1xf32>
    %10 = arith.addf %7, %9 : vector<8x1xf32>
    %c0_6 = arith.constant 0 : index
    %c0_7 = arith.constant 0 : index
    %11 = vector.load %arg5[%c0_6, %c0_7] : memref<8x1xf32, #tpu.memory_space<vmem>>, vector<8x1xf32>
    tpu.vector_store %arg5[%c0_6, %c0_7], %10 {strides = array<i32>} : memref<8x1xf32, #tpu.memory_space<vmem>>, vector<8x1xf32>,
    %c0_i32_8 = arith.constant 0 : i32
    %12 = arith.cmpi eq, %arg1, %c0_i32_8 : i32
    %13 = arith.extui %12 : i1 to i32
    %c0_i32_9 = arith.constant 0 : i32
    %14 = arith.cmpi ne, %13, %c0_i32_9 : i32
    scf.if %14 {
      %c0_10 = arith.constant 0 : index
      %c0_11 = arith.constant 0 : index
      %15 = vector.load %arg5[%c0_10, %c0_11] : memref<8x1xf32, #tpu.memory_space<vmem>>, vector<8x1xf32>
      %c0_12 = arith.constant 0 : index
      %c0_13 = arith.constant 0 : index
      %16 = memref.load %arg4[%c0_12, %c0_13] : memref<1x1xf32, #tpu.memory_space<smem>>
      %17 = vector.broadcast %16 : f32 to vector<8x1xf32>
      %18 = arith.addf %15, %17 : vector<8x1xf32>
      %cst_14 = arith.constant 0.000000e+00 : f32
      %19 = vector.broadcast %cst_14 : f32 to vector<8x1xf32>
      %20 = arith.subf %19, %18 : vector<8x1xf32>
      %21 = math.exp %20 : vector<8x1xf32>
      %cst_15 = arith.constant 1.000000e+00 : f32
      %22 = vector.broadcast %cst_15 : f32 to vector<8x1xf32>
      %23 = arith.addf %22, %21 : vector<8x1xf32>
      %cst_16 = arith.constant 1.000000e+00 : f32
      %24 = vector.broadcast %cst_16 : f32 to vector<8x1xf32>
      %25 = arith.divf %24, %23 : vector<8x1xf32>
      %c0_17 = arith.constant 0 : index
      %c0_18 = arith.constant 0 : index
      %26 = vector.load %arg5[%c0_17, %c0_18] : memref<8x1xf32, #tpu.memory_space<vmem>>, vector<8x1xf32>
      tpu.vector_store %arg5[%c0_17, %c0_18], %25 {strides = array<i32>} : memref<8x1xf32, #tpu.memory_space<vmem>>, vector<8x1xf32>,
    } else {
    }
    return
  }
  func.func @transform_0(%arg0: i32, %arg1: i32) -> (i32, i32) {
    %c0_i32 = arith.constant 0 : i32
    return %arg0, %arg1 : i32, i32
  }
  func.func @transform_1(%arg0: i32, %arg1: i32) -> (i32, i32) {
    %c0_i32 = arith.constant 0 : i32
    %c0_i32_0 = arith.constant 0 : i32
    return %c0_i32, %arg1 : i32, i32
  }
  func.func @transform_2(%arg0: i32, %arg1: i32) -> (i32, i32) {
    %c0_i32 = arith.constant 0 : i32
    %c0_i32_0 = arith.constant 0 : i32
    %c0_i32_1 = arith.constant 0 : i32
    return %c0_i32, %c0_i32_0 : i32, i32
  }
  func.func @transform_3(%arg0: i32, %arg1: i32) -> (i32, i32) {
    %c0_i32 = arith.constant 0 : i32
    %c0_i32_0 = arith.constant 0 : i32
    return %arg0, %c0_i32 : i32, i32
  }
}

</mosaic_0001>

<llo_original>
// kernel: tpu_custom_call.1
$region0: #{tpu_custom_call.1}
  #allocation0 [shape = 'u32[]', space=smem, size = 0x4, offset = 0x4, fixed_abs, tag = 'smem constant byte address 0x4 - core index']
  #allocation1 [shape = 'u32[144,128]{1,0:T(1,128)}', space=vmem, size = 0x12000, scoped, tag = 'internal scratch']
  #allocation2 [shape = 'f32[1,1]{1,0:T(1,128)S(6)}', space=smem, size = 0x200, scoped, tag = 'scoped memory for tpu_custom_call.1']
  %s0 = inlined_call_operand.hbm [shape: f32[8,32], index: 0, kind: input, shape index: {}]
  %s1 = inlined_call_operand.vmem [shape: f32[1,32], index: 1, kind: input, shape index: {}]
  %s2 = inlined_call_operand.<no memory space> [shape: f32[1,1], index: 2, kind: input, shape index: {}]
  %s3 = inlined_call_operand.vmem [shape: f32[8,1], index: 3, kind: output, shape index: {}]
  %s4 = sld [smem:[#allocation0]]
  $region34: #{tpu_custom_call.1} parent=0
    _
  %s6 = ssub.s32 1, %s4
  %s7 = scalar_select 0, %s6, %s4
  %8 = sst [smem:[#allocation2]] %s2
  $region1: #{tpu_custom_call.1} parent=0
    #allocation3 [shape = 'u8[4096]{0}', space=vmem, size = 0x1000, scoped, tag = 'input window, operand 0, single buffered']
    #allocation4 [shape = 's32[1]{0}', space=sflag, size = 0x4, scoped, tag = 'scoped memory for tpu_custom_call.1']
    %9 = vsyncpa [#allocation4], 0
    // Predicated region
    $region2: #{tpu_custom_call.1} parent=1 // pred_check
      _
    $region3: #{tpu_custom_call.1} parent=1 // pred_check_branch
      %11 = sbr.rel (0) target = $region5
    $region4: #{tpu_custom_call.1} parent=1 // pred_region
      %s13 = ssub.s32 128, 128
      %14 = vsyncadd [#allocation4], %s13
      %s16 = sshll.u32 [#allocation3], 4
      %s17 = int_to_ptr.vmem [resolvable:$true] %s16
      %19 = dma.hbm_to_vmem [thread:$0]  %s0, 128, %s17, [#allocation4]
    $region5: #{tpu_custom_call.1} parent=1 // pred_fallthru
      _
    // Predicated region
    $region6: #{tpu_custom_call.1} parent=1 // pred_check
      _
    $region7: #{tpu_custom_call.1} parent=1 // pred_check_branch
      %21 = sbr.rel (0) target = $region9
    $region8: #{tpu_custom_call.1} parent=1 // pred_region
      _
    $region9: #{tpu_custom_call.1} parent=1 // pred_fallthru
      _
    // Predicated region
    $region10: #{tpu_custom_call.1} parent=1 // pred_check
      _
    $region11: #{tpu_custom_call.1} parent=1 // pred_check_branch
      %23 = sbr.rel (0) target = $region13
    $region12: #{tpu_custom_call.1} parent=1 // pred_region
      _
    $region13: #{tpu_custom_call.1} parent=1 // pred_fallthru
      _
    // Predicated region
    $region14: #{tpu_custom_call.1} parent=1 // pred_check
      _
    $region15: #{tpu_custom_call.1} parent=1 // pred_check_branch
      %25 = sbr.rel (0) target = $region17
    $region16: #{tpu_custom_call.1} parent=1 // pred_region
      %26 = dma.done [#allocation4], 128
    $region17: #{tpu_custom_call.1} parent=1 // pred_fallthru
      _
    %p27 = scmp.eq.s32.totalorder 0, 0
    // Predicated region
    $region18: #{tpu_custom_call.1} parent=1 // pred_check
      %p28 = pneg %p27
    $region19: #{tpu_custom_call.1} parent=1 // pred_check_branch
      %30 = sbr.rel (%p28) target = $region21
    $region20: #{tpu_custom_call.1} parent=1 // pred_region
      %vm31 = vcmask 7168
      %32 = vst.msk [vmem:[%s3] sm:$0xff] %vm31, 0.0
    $region21: #{tpu_custom_call.1} parent=1 // pred_fallthru
      _
    %v33 = vld [vmem:[#allocation3] sm:$0xff]
    %v34 = vld [vmem:[%s1] sm:$0x1]
    %v36 = vlaneseq
    %v37 = vshrl.u32 %v36, 7
    %v38 = vsub.s32 0, %v37
    %v39 = vrot.slane %v34, %v38
    %v41 = vmul.f32 %v33, %v39
    %v42 = vld [vmem:[%s3] sm:$0xff]
    %vm43 = vcmask 261120
    %v44 = vsel %vm43, %v41, 0.0
    %45 = vadd.xlane.f32.xlu0 %v44
    %v46 = vpop.xlane.xlu0 %45
    %v47 = vadd.f32 %v42, %v46
    %vm48 = vcmask 7168
    %49 = vst.msk [vmem:[%s3] sm:$0xff] %vm48, %v47
    // Predicated region
    $region22: #{tpu_custom_call.1} parent=1 // pred_check
      %p50 = pneg %p27
    $region23: #{tpu_custom_call.1} parent=1 // pred_check_branch
      %52 = sbr.rel (%p50) target = $region25
    $region24: #{tpu_custom_call.1} parent=1 // pred_region
      %v53 = vld [vmem:[%s3] sm:$0xff]
      %s54 = sld [smem:[#allocation2]]
      %v55 = vstv %s54
      %v56 = vadd.f32 %v53, %v55
      %v57 = vsub.f32 0.0, %v56
      %v58 = vmul.f32 %v57, 1.442695
      %v59 = vpow.pop %v58
      %v60 = vadd.f32 %v59, 1.0
      %v61 = vrcp.pop %v60
      %v62 = vmul.f32 1.0, %v61
      %63 = vst.msk [vmem:[%s3] sm:$0xff] %vm48, %v62
    $region25: #{tpu_custom_call.1} parent=1 // pred_fallthru
      _
    // Predicated region
    $region26: #{tpu_custom_call.1} parent=1 // pred_check
      _
    $region27: #{tpu_custom_call.1} parent=1 // pred_check_branch
      %65 = sbr.rel (0) target = $region29
    $region28: #{tpu_custom_call.1} parent=1 // pred_region
      _
    $region29: #{tpu_custom_call.1} parent=1 // pred_fallthru
      _
    // Predicated region
    $region30: #{tpu_custom_call.1} parent=1 // pred_check
      _
    $region31: #{tpu_custom_call.1} parent=1 // pred_check_branch
      %67 = sbr.rel (0) target = $region33
    $region32: #{tpu_custom_call.1} parent=1 // pred_region
      _
    $region33: #{tpu_custom_call.1} parent=1 // pred_fallthru
      _
    %68 = vsyncpa [#allocation4], 1

</llo_original>
